<compile_context>
chip_gen: v5e
topology: v5e:2x2
jax: 0.10.0
libtpu: 0.0.40
codegen_flags: <defaults>
</compile_context>

<pallas_src>
import functools

import jax
import jax.numpy as jnp
from jax.experimental import pallas as pl
from jax.experimental.pallas import tpu as pltpu


def _round_up(n, m):
    return ((n + m - 1) // m) * m


def qnet_kernel(x_ref, p1_ref, p2_ref, o_ref, *, state_dim, hidden_pad):
    # p1 = [W1 ; b1 ; zero-pad]  shape (round8(state_dim+1), hidden_pad)
    # p2 = [W2 ; zero-pad ; b2]  shape (round8(hidden_pad+1), action_dim)
    w1 = p1_ref[:state_dim, :]                         # (state_dim, hidden_pad)
    b1 = p1_ref[state_dim:state_dim + 1, :]            # (1, hidden_pad)
    w2 = p2_ref[:hidden_pad, :]                        # (hidden_pad, action_dim)
    b2 = p2_ref[hidden_pad:hidden_pad + 1, :]          # (1, action_dim)

    # hidden = relu(x @ W1 + b1): MXU matmul with f32 accumulation, bias add +
    # ReLU in f32 on the VPU (portable to v5e: no bf16 VALU there).
    h = jnp.dot(x_ref[...], w1, preferred_element_type=jnp.float32)
    h = jnp.maximum(h + b1.astype(jnp.float32), 0.0)

    # Only cast the MXU operand if the weights are a narrower dtype; keep the
    # f32 path otherwise (no redundant pack/unpack in pure f32).
    lhs = h if h.dtype == w2.dtype else h.astype(w2.dtype)
    out = jnp.dot(lhs, w2, preferred_element_type=jnp.float32)
    out = out + b2.astype(jnp.float32)
    o_ref[...] = out.astype(o_ref.dtype)


def pack_params(w1, b1, w2, b2):
    """Pack (W1,b1) / (W2,b2) into two lane/sublane-padded slabs (done once)."""
    state_dim, hidden_dim = w1.shape
    action_dim = w2.shape[1]
    hidden_pad = _round_up(hidden_dim, 128)            # lane-dense hidden slab
    r1 = _round_up(state_dim + 1, 8)
    r2 = _round_up(hidden_pad + 1, 8)
    p1 = (jnp.zeros((r1, hidden_pad), w1.dtype)
          .at[:state_dim, :hidden_dim].set(w1)
          .at[state_dim, :hidden_dim].set(b1.reshape(hidden_dim)))
    p2 = (jnp.zeros((r2, action_dim), w2.dtype)
          .at[:hidden_dim].set(w2)
          .at[hidden_pad].set(b2.reshape(action_dim)))
    return p1, p2, hidden_pad


def _choose_tb(B, tb):
    # B < 16: one full block (block dim == array dim, exempt from the 8-rule).
    # B >= 16: ~half the batch per tile (multiple of 8, capped at `tb`) so the
    # grid has >=2 steps for v7x's two TensorCores while tiles stay large.
    if B < 16:
        return B
    return max(8, min(tb, _round_up((B + 1) // 2, 8)))


def qnet_forward(x, p1, p2, *, state_dim, hidden_pad, action_dim, tb=1024):
    B = x.shape[0]
    TB = _choose_tb(B, tb)

    kernel = functools.partial(
        qnet_kernel, state_dim=state_dim, hidden_pad=hidden_pad)

    return pl.pallas_call(
        kernel,
        out_shape=jax.ShapeDtypeStruct((B, action_dim), x.dtype),
        grid=(pl.cdiv(B, TB),),
        in_specs=[
            # x tiled along batch; last dim == full array dim (exempt from the
            # 128-lane rule). Ragged last tile is masked on the output write.
            pl.BlockSpec((TB, state_dim), lambda i: (i, 0)),
            # Weight slabs: full blocks, constant index_map -> stay resident.
            pl.BlockSpec(p1.shape, lambda i: (0, 0)),
            pl.BlockSpec(p2.shape, lambda i: (0, 0)),
        ],
        out_specs=pl.BlockSpec((TB, action_dim), lambda i: (i, 0)),
        compiler_params=pltpu.CompilerParams(
            # No-op on single-TC v5e/v6e; lets v7x shard the batch grid.
            dimension_semantics=("parallel",)),
    )(x, p1, p2)


def init_params(key, state_dim, hidden_dim, action_dim, dtype=jnp.float32):
    # Deterministic synthetic init mimicking torch.nn.Linear default
    # (uniform in [-1/sqrt(fan_in), 1/sqrt(fan_in)]).
    k1, k2, k3, k4 = jax.random.split(key, 4)
    lim1 = 1.0 / jnp.sqrt(jnp.array(state_dim, dtype))
    lim2 = 1.0 / jnp.sqrt(jnp.array(hidden_dim, dtype))
    w1 = jax.random.uniform(k1, (state_dim, hidden_dim), dtype, -lim1, lim1)
    b1 = jax.random.uniform(k2, (1, hidden_dim), dtype, -lim1, lim1)
    w2 = jax.random.uniform(k3, (hidden_dim, action_dim), dtype, -lim2, lim2)
    b2 = jax.random.uniform(k4, (1, action_dim), dtype, -lim2, lim2)
    return w1, b1, w2, b2


def _reference(x, w1, b1, w2, b2):
    return jnp.maximum(x @ w1 + b1, 0.0) @ w2 + b2


if __name__ == "__main__":
    # Small shapes consistent with a DQN Qnet (CartPole-ish dims).
    state_dim, hidden_dim, action_dim = 4, 32, 2

    key = jax.random.PRNGKey(0)
    kx, kp, kx2 = jax.random.split(key, 3)
    w1, b1, w2, b2 = init_params(kp, state_dim, hidden_dim, action_dim)
    p1, p2, hidden_pad = pack_params(w1, b1, w2, b2)   # packed once, reused

    fwd = functools.partial(qnet_forward, state_dim=state_dim,
                            hidden_pad=hidden_pad, action_dim=action_dim)

    # Case 1: tiny inference batch (single full-block grid step).
    x = jax.random.normal(kx, (8, state_dim), jnp.float32)
    out = fwd(x, p1, p2)
    jax.block_until_ready(out)
    assert out.shape == (8, action_dim)
    assert jnp.allclose(out, _reference(x, w1, b1, w2, b2), atol=1e-5, rtol=1e-5)

    # Case 2: training-size, non-multiple-of-8 batch. No wrapper pad/slice:
    # TB = 152, grid = (2,), last tile is ragged and masked on write.
    xb = jax.random.normal(kx2, (300, state_dim), jnp.float32)
    outb = fwd(xb, p1, p2)
    jax.block_until_ready(outb)
    assert outb.shape == (300, action_dim)
    assert jnp.allclose(outb, _reference(xb, w1, b1, w2, b2), atol=1e-5, rtol=1e-5)

    print("KERNEL_OK")
</pallas_src>

<mosaic_0001>
module attributes {stable_mosaic.version = 11 : i64} {
  func.func @qnet_kernel(%arg0: i32, %arg1: memref<8x4xf32, #tpu.memory_space<vmem>>, %arg2: memref<8x128xf32, #tpu.memory_space<vmem>>, %arg3: memref<136x2xf32, #tpu.memory_space<vmem>>, %arg4: memref<8x2xf32, #tpu.memory_space<vmem>>) attributes {dimension_semantics = [#tpu.dimension_semantics<parallel>], iteration_bounds = array<i64: 1>, scalar_prefetch = 0 : i64, scratch_operands = 0 : i64, tpu.core_type = #tpu.core_type<tc>, window_params = [{transform_indices = @transform_0, window_bounds = array<i64: 8, 4>}, {pipeline_mode = #tpu.pipeline_mode<synchronous>, transform_indices = @transform_1, window_bounds = array<i64: 8, 128>}, {pipeline_mode = #tpu.pipeline_mode<synchronous>, transform_indices = @transform_2, window_bounds = array<i64: 136, 2>}, {transform_indices = @transform_3, window_bounds = array<i64: 8, 2>}]} {
    %c0 = arith.constant 0 : index
    %c0_0 = arith.constant 0 : index
    %0 = vector.load %arg2[%c0, %c0_0] : memref<8x128xf32, #tpu.memory_space<vmem>>, vector<4x128xf32>
    %c4 = arith.constant 4 : index
    %c0_1 = arith.constant 0 : index
    %1 = vector.load %arg2[%c4, %c0_1] : memref<8x128xf32, #tpu.memory_space<vmem>>, vector<1x128xf32>
    %c0_2 = arith.constant 0 : index
    %c0_3 = arith.constant 0 : index
    %2 = vector.load %arg3[%c0_2, %c0_3] : memref<136x2xf32, #tpu.memory_space<vmem>>, vector<128x2xf32>
    %c128 = arith.constant 128 : index
    %c0_4 = arith.constant 0 : index
    %3 = vector.load %arg3[%c128, %c0_4] : memref<136x2xf32, #tpu.memory_space<vmem>>, vector<1x2xf32>
    %c0_5 = arith.constant 0 : index
    %c0_6 = arith.constant 0 : index
    %4 = vector.load %arg1[%c0_5, %c0_6] : memref<8x4xf32, #tpu.memory_space<vmem>>, vector<8x4xf32>
    %cst = arith.constant dense<0.000000e+00> : vector<8x128xf32>
    %5 = tpu.matmul %4, %0, %cst {dimension_numbers = #tpu.dot_dimension_numbers<[1], [0], [0], [1], [0, 0, 1, 1], [], []>} : vector<8x4xf32>, vector<4x128xf32>, vector<8x128xf32> -> vector<8x128xf32>
    %6 = vector.broadcast %1 : vector<1x128xf32> to vector<8x128xf32>
    %7 = arith.addf %5, %6 : vector<8x128xf32>
    %cst_7 = arith.constant 0.000000e+00 : f32
    %8 = vector.broadcast %cst_7 : f32 to vector<8x128xf32>
    %9 = arith.maximumf %7, %8 : vector<8x128xf32>
    %cst_8 = arith.constant dense<0.000000e+00> : vector<8x2xf32>
    %10 = tpu.matmul %9, %2, %cst_8 {dimension_numbers = #tpu.dot_dimension_numbers<[1], [0], [0], [1], [0, 0, 1, 1], [], []>} : vector<8x128xf32>, vector<128x2xf32>, vector<8x2xf32> -> vector<8x2xf32>
    %11 = vector.broadcast %3 : vector<1x2xf32> to vector<8x2xf32>
    %12 = arith.addf %10, %11 : vector<8x2xf32>
    %c0_9 = arith.constant 0 : index
    %c0_10 = arith.constant 0 : index
    %13 = vector.load %arg4[%c0_9, %c0_10] : memref<8x2xf32, #tpu.memory_space<vmem>>, vector<8x2xf32>
    tpu.vector_store %arg4[%c0_9, %c0_10], %12 {strides = array<i32>} : memref<8x2xf32, #tpu.memory_space<vmem>>, vector<8x2xf32>,
    return
  }
  func.func @transform_0(%arg0: i32) -> (i32, i32) {
    %c0_i32 = arith.constant 0 : i32
    %c0_i32_0 = arith.constant 0 : i32
    return %arg0, %c0_i32 : i32, i32
  }
  func.func @transform_1(%arg0: i32) -> (i32, i32) {
    %c0_i32 = arith.constant 0 : i32
    %c0_i32_0 = arith.constant 0 : i32
    %c0_i32_1 = arith.constant 0 : i32
    return %c0_i32, %c0_i32_0 : i32, i32
  }
  func.func @transform_2(%arg0: i32) -> (i32, i32) {
    %c0_i32 = arith.constant 0 : i32
    %c0_i32_0 = arith.constant 0 : i32
    %c0_i32_1 = arith.constant 0 : i32
    return %c0_i32, %c0_i32_0 : i32, i32
  }
  func.func @transform_3(%arg0: i32) -> (i32, i32) {
    %c0_i32 = arith.constant 0 : i32
    %c0_i32_0 = arith.constant 0 : i32
    return %arg0, %c0_i32 : i32, i32
  }
}

</mosaic_0001>

<llo_original>
// kernel: tpu_custom_call.1
$region0: #{tpu_custom_call.1}
  #allocation0 [shape = 'u32[]', space=smem, size = 0x4, offset = 0x4, fixed_abs, tag = 'smem constant byte address 0x4 - core index']
  #allocation1 [shape = 'u32[72,128]{1,0:T(1,128)}', space=vmem, size = 0x9000, scoped, tag = 'internal scratch']
  %s0 = inlined_call_operand.vmem [shape: f32[8,4], index: 0, kind: input, shape index: {}]
  %s1 = inlined_call_operand.vmem [shape: f32[8,128], index: 1, kind: input, shape index: {}]
  %s2 = inlined_call_operand.vmem [shape: f32[136,2], index: 2, kind: input, shape index: {}]
  %s3 = inlined_call_operand.vmem [shape: f32[8,2], index: 3, kind: output, shape index: {}]
  %s4 = sld [smem:[#allocation0]]
  $region22: #{tpu_custom_call.1} parent=0
    _
  %s6 = ssub.s32 1, %s4
  %s7 = scalar_select 0, %s6, %s4
  // Predicated region
  $region2: #{tpu_custom_call.1} parent=0 // pred_check
    _
  $region3: #{tpu_custom_call.1} parent=0 // pred_check_branch
    %9 = sbr.rel (0) target = $region5
  $region4: #{tpu_custom_call.1} parent=0 // pred_region
    _
  $region5: #{tpu_custom_call.1} parent=0 // pred_fallthru
    _
  // Predicated region
  $region6: #{tpu_custom_call.1} parent=0 // pred_check
    _
  $region7: #{tpu_custom_call.1} parent=0 // pred_check_branch
    %11 = sbr.rel (0) target = $region9
  $region8: #{tpu_custom_call.1} parent=0 // pred_region
    _
  $region9: #{tpu_custom_call.1} parent=0 // pred_fallthru
    _
  // Predicated region
  $region10: #{tpu_custom_call.1} parent=0 // pred_check
    _
  $region11: #{tpu_custom_call.1} parent=0 // pred_check_branch
    %13 = sbr.rel (0) target = $region13
  $region12: #{tpu_custom_call.1} parent=0 // pred_region
    _
  $region13: #{tpu_custom_call.1} parent=0 // pred_fallthru
    _
  %v14 = vld [vmem:[%s1] sm:$0xf]
  %v15 = vld [vmem:[%s1 + $0x4] sm:$0x1]
  %v16 = vld [vmem:[%s2] sm:$0xff]
  %v17 = vld [vmem:[%s2 + $0x8] sm:$0xff]
  %v18 = vld [vmem:[%s2 + $0x10] sm:$0xff]
  %v19 = vld [vmem:[%s2 + $0x18] sm:$0xff]
  %v20 = vld [vmem:[%s2 + $0x20] sm:$0xff]
  %v21 = vld [vmem:[%s2 + $0x28] sm:$0xff]
  %v22 = vld [vmem:[%s2 + $0x30] sm:$0xff]
  %v23 = vld [vmem:[%s2 + $0x38] sm:$0xff]
  %v24 = vld [vmem:[%s2 + $0x40] sm:$0xff]
  %v25 = vld [vmem:[%s2 + $0x48] sm:$0xff]
  %v26 = vld [vmem:[%s2 + $0x50] sm:$0xff]
  %v27 = vld [vmem:[%s2 + $0x58] sm:$0xff]
  %v28 = vld [vmem:[%s2 + $0x60] sm:$0xff]
  %v29 = vld [vmem:[%s2 + $0x68] sm:$0xff]
  %v30 = vld [vmem:[%s2 + $0x70] sm:$0xff]
  %v31 = vld [vmem:[%s2 + $0x78] sm:$0xff]
  %v32 = vld [vmem:[%s2 + $0x80] sm:$0x1]
  %v33 = vld [vmem:[%s0] sm:$0xff]
  %v34 = vperm.slane %v15, 0
  %vm35 = vcmask 31744
  %v37 = vsel %vm35, %v33, 0
  %vm39 = vcmask 1043456
  %v41 = vsel %vm39, %v14, 0
  %43 = vmatpush.msra.mxu0 0.0
  %44 = vmatpush.msra.mxu0 0.0
  %45 = vmatpush.msra.mxu0 0.0
  %46 = vmatpush.msra.mxu0 0.0
  %47 = vmatpush.msra.mxu0 0.0
  %48 = vmatpush.msra.mxu0 0.0
  %49 = vmatpush.msra.mxu0 0.0
  %50 = vmatpush.msra.mxu0 0.0
  %51 = vmatpush.msra.mxu0 0.0
  %52 = vmatpush.msra.mxu0 0.0
  %53 = vmatpush.msra.mxu0 0.0
  %54 = vmatpush.msra.mxu0 0.0
  %55 = vmatpush.msra.mxu0 0.0
  %56 = vmatpush.msra.mxu0 0.0
  %57 = vmatpush.msra.mxu0 0.0
  %58 = vmatpush.msra.mxu0 %v41
  %59 = vmatmul.f32.gmra.mxu0 %v37
  %v60 = vpop.f32.mrf.mxu0
  %v61 = vadd.f32 %v34, %v60
  %62 = vdwg.mxu0
  %v63 = vmax.f32 %v61, 0.0
  %v64 = vperm.slane %v32, 0
  %65 = vmatpush.msra.mxu0 %v31
  %66 = vmatpush.msra.mxu0 %v30
  %67 = vmatpush.msra.mxu0 %v29
  %68 = vmatpush.msra.mxu0 %v28
  %69 = vmatpush.msra.mxu0 %v27
  %70 = vmatpush.msra.mxu0 %v26
  %71 = vmatpush.msra.mxu0 %v25
  %72 = vmatpush.msra.mxu0 %v24
  %73 = vmatpush.msra.mxu0 %v23
  %74 = vmatpush.msra.mxu0 %v22
  %75 = vmatpush.msra.mxu0 %v21
  %76 = vmatpush.msra.mxu0 %v20
  %77 = vmatpush.msra.mxu0 %v19
  %78 = vmatpush.msra.mxu0 %v18
  %79 = vmatpush.msra.mxu0 %v17
  %80 = vmatpush.msra.mxu0 %v16
  %81 = vmatmul.f32.gmra.mxu0 %v63
  %v82 = vpop.f32.mrf.mxu0
  %v83 = vadd.f32 %v64, %v82
  %84 = vdwg.mxu0
  %vm85 = vcmask 15360
  %86 = vst.msk [vmem:[%s3] sm:$0xff] %vm85, %v83
  // Predicated region
  $region14: #{tpu_custom_call.1} parent=0 // pred_check
    _
  $region15: #{tpu_custom_call.1} parent=0 // pred_check_branch
    %88 = sbr.rel (0) target = $region17
  $region16: #{tpu_custom_call.1} parent=0 // pred_region
    _
  $region17: #{tpu_custom_call.1} parent=0 // pred_fallthru
    _
  // Predicated region
  $region18: #{tpu_custom_call.1} parent=0 // pred_check
    _
  $region19: #{tpu_custom_call.1} parent=0 // pred_check_branch
    %90 = sbr.rel (0) target = $region21
  $region20: #{tpu_custom_call.1} parent=0 // pred_region
    _
  $region21: #{tpu_custom_call.1} parent=0 // pred_fallthru
    _

</llo_original>
